<compile_context>
chip_gen: v7x
topology: tpu7x:2x2x1
jax: 0.10.0
libtpu: 0.0.40
codegen_flags: <defaults>
</compile_context>

<pallas_src>
import functools
import math

import jax
import jax.numpy as jnp
from jax import lax
from jax.experimental import pallas as pl
from jax.experimental.pallas import tpu as pltpu


# ----------------------------------------------------------------------------
# Single fused kernel: channel-wise mixing (VPU, SMEM scalar weights)
#                    + dense degree-0 layer (MXU)
# ----------------------------------------------------------------------------
def _linear_p_kernel(w_ref, x_ref, x0_ref, w0t_ref, b0_ref, y_ref, y0_ref,
                     *, c_in, c_out, l_dim):
    # ---- channel-wise per-degree mixing --------------------------------
    # w_ref  : SMEM, flat (C_in*C_out*L,); w[c, d, l] at (c*C_out + d)*L + l
    # x_ref  : VMEM, (L, C_in, P*M)
    # y_ref  : VMEM, (L, C_out, P*M)
    # y[l, d, :] = sum_c w[c, d, l] * x[l, c, :]   (scalar-from-SMEM x vreg FMA)
    x = x_ref[...].astype(jnp.float32)            # (L, C_in, P*M)
    for l in range(l_dim):
        for d in range(c_out):
            acc = w_ref[d * l_dim + l] * x[l, 0, :]
            for c in range(1, c_in):
                acc = acc + w_ref[(c * c_out + d) * l_dim + l] * x[l, c, :]
            y_ref[l, d, :] = acc.astype(y_ref.dtype)

    # ---- dense degree-0 path: y_0 = x_0 @ w0t + b0 ----------------------
    # w0t is stored (F_in, F_out): contract dim 1 of x_0 with dim 0 of w0t,
    # so no transpose / XLU relayout of the weight inside the kernel.
    y0 = lax.dot_general(
        x0_ref[...], w0t_ref[...],
        dimension_numbers=(((1,), (0,)), ((), ())),
        preferred_element_type=jnp.float32,
    ) + b0_ref[...].astype(jnp.float32)
    y0_ref[...] = y0.astype(y0_ref.dtype)


def linear_p_apply(params, x_lcb, x_0):
    """Kernel-layout entry point (production path).

    x_lcb : (L, C_in, P*M) activations with P*M folded onto lanes.
    x_0   : (B, F_in)
    returns (y_lcb: (L, C_out, P*M), y_0: (B, F_out))
    """
    weights, w0t, b0 = params          # (C_in,C_out,L), (F_in,F_out), (1,F_out)
    L, C_in, BM = x_lcb.shape
    C_out = weights.shape[1]
    B, F_in = x_0.shape
    F_out = w0t.shape[1]

    # Metadata-only flatten of a tiny contiguous parameter; it lands in SMEM.
    w_flat = weights.reshape(-1)

    kernel = functools.partial(_linear_p_kernel, c_in=C_in, c_out=C_out, l_dim=L)

    y_lcb, y_0 = pl.pallas_call(
        kernel,
        out_shape=(
            jax.ShapeDtypeStruct((L, C_out, BM), x_lcb.dtype),
            jax.ShapeDtypeStruct((B, F_out), x_0.dtype),
        ),
        grid_spec=pltpu.PrefetchScalarGridSpec(
            num_scalar_prefetch=0,
            grid=(1,),                               # whole problem fits VMEM easily
            in_specs=[
                pl.BlockSpec(memory_space=pltpu.MemorySpace.SMEM),   # mixing weights (scalars)
                pl.BlockSpec((L, C_in, BM), lambda i: (0, 0, 0)),    # x  (L, C_in, P*M)
                pl.BlockSpec((B, F_in), lambda i: (0, 0)),           # x_0
                pl.BlockSpec((F_in, F_out), lambda i: (0, 0)),       # w0 (pre-transposed)
                pl.BlockSpec((1, F_out), lambda i: (0, 0)),          # bias (low-priority VMEM)
            ],
            out_specs=(
                pl.BlockSpec((L, C_out, BM), lambda i: (0, 0, 0)),   # y  (L, C_out, P*M)
                pl.BlockSpec((B, F_out), lambda i: (0, 0)),          # y_0
            ),
        ),
        # Single-step grid; "parallel" only pays off on v7x once a real L/token
        # grid exists for its two TensorCores (no effect on v5e/v6e).
        compiler_params=pltpu.CompilerParams(dimension_semantics=("arbitrary",)),
    )(w_flat, x_lcb, x_0, w0t, b0)
    return y_lcb, y_0


def linear_p_forward(params, x, x_0):
    """Module-compatible wrapper: x (P, C_in, L, M) -> y (P, C_out, L, M).

    The transposes below are boundary-only adaptation to the PyTorch module's
    (P, C, L, M) convention.
    TODO(synk): keep the (L, C, P*M) kernel layout end-to-end in the
    surrounding model and delete these boundary transposes.
    """
    weights = params[0]
    P, C_in, L, M = x.shape
    C_out = weights.shape[1]

    x_lcb = jnp.transpose(x, (2, 1, 0, 3)).reshape(L, C_in, P * M)
    y_lcb, y_0 = linear_p_apply(params, x_lcb, x_0)
    y = jnp.transpose(y_lcb.reshape(L, C_out, P, M), (2, 1, 0, 3))
    return y, y_0


# ----------------------------------------------------------------------------
# Parameter init mirroring the PyTorch module's shapes / init scheme
# (w0 stored pre-transposed, bias stored (1, F_out) -- kernel-friendly layouts)
# ----------------------------------------------------------------------------
def init_linear_p_params(key, input_channel_list, output_channel_list, L=1):
    c_in, f_in = input_channel_list
    c_out, f_out = output_channel_list
    k_w, k_w0, k_b0 = jax.random.split(key, 3)

    # kaiming_uniform_(a=sqrt(5)) on (c_in, c_out, L): fan_in = c_out * L
    bound_w = 1.0 / math.sqrt(c_out * L)
    weights = jax.random.uniform(k_w, (c_in, c_out, L), jnp.float32,
                                 minval=-bound_w, maxval=bound_w)

    # nn.Linear default init: U(-1/sqrt(f_in), 1/sqrt(f_in)) for W and b.
    # Stored PRE-TRANSPOSED as (F_in, F_out) so the kernel needs no relayout.
    bound_l = 1.0 / math.sqrt(f_in)
    w0t = jax.random.uniform(k_w0, (f_in, f_out), jnp.float32,
                             minval=-bound_l, maxval=bound_l)
    b0 = jax.random.uniform(k_b0, (1, f_out), jnp.float32,
                            minval=-bound_l, maxval=bound_l)
    return weights, w0t, b0


if __name__ == "__main__":
    key = jax.random.PRNGKey(0)
    k_params, k_x, k_x0 = jax.random.split(key, 3)

    # Small shapes consistent with the module:
    #   input_channel_list = [4, 32], output_channel_list = [8, 16], L = 2
    input_channel_list = [4, 32]
    output_channel_list = [8, 16]
    L = 2
    P, M = 2, 16      # batch and trailing (e.g. spherical-harmonic m) dims
    B = 2             # batch for the scalar (degree-0) features

    params = init_linear_p_params(k_params, input_channel_list,
                                  output_channel_list, L=L)
    weights, w0t, b0 = params

    x = jax.random.normal(k_x, (P, input_channel_list[0], L, M), jnp.float32)
    x_0 = jax.random.normal(k_x0, (B, input_channel_list[1]), jnp.float32)

    y, y_0 = linear_p_forward(params, x, x_0)
    jax.block_until_ready((y, y_0))

    # Reference check against plain-JAX einsum / matmul.
    y_ref = jnp.einsum('cdl,pclm->pdlm', weights, x)
    y0_ref = x_0 @ w0t + b0
    assert y.shape == (P, output_channel_list[0], L, M)
    assert y_0.shape == (B, output_channel_list[1])
    assert jnp.allclose(y, y_ref, atol=1e-5, rtol=1e-5)
    assert jnp.allclose(y_0, y0_ref, atol=1e-5, rtol=1e-5)

    print("KERNEL_OK")
</pallas_src>

<mosaic_0001>
module attributes {stable_mosaic.version = 11 : i64} {
  func.func @_linear_p_kernel(%arg0: i32, %arg1: memref<64xf32, #tpu.memory_space<smem>>, %arg2: memref<2x4x32xf32, #tpu.memory_space<vmem>>, %arg3: memref<2x32xf32, #tpu.memory_space<vmem>>, %arg4: memref<32x16xf32, #tpu.memory_space<vmem>>, %arg5: memref<1x16xf32, #tpu.memory_space<vmem>>, %arg6: memref<2x8x32xf32, #tpu.memory_space<vmem>>, %arg7: memref<2x16xf32, #tpu.memory_space<vmem>>) attributes {dimension_semantics = [#tpu.dimension_semantics<arbitrary>], iteration_bounds = array<i64: 1>, scalar_prefetch = 0 : i64, scratch_operands = 0 : i64, tpu.core_type = #tpu.core_type<tc>, window_params = [{transform_indices = @transform_0, window_bounds = array<i64: 64>}, {pipeline_mode = #tpu.pipeline_mode<synchronous>, transform_indices = @transform_1, window_bounds = array<i64: 2, 4, 32>}, {pipeline_mode = #tpu.pipeline_mode<synchronous>, transform_indices = @transform_2, window_bounds = array<i64: 2, 32>}, {pipeline_mode = #tpu.pipeline_mode<synchronous>, transform_indices = @transform_3, window_bounds = array<i64: 32, 16>}, {pipeline_mode = #tpu.pipeline_mode<synchronous>, transform_indices = @transform_4, window_bounds = array<i64: 1, 16>}, {pipeline_mode = #tpu.pipeline_mode<synchronous>, transform_indices = @transform_5, window_bounds = array<i64: 2, 8, 32>}, {pipeline_mode = #tpu.pipeline_mode<synchronous>, transform_indices = @transform_6, window_bounds = array<i64: 2, 16>}]} {
    %c0 = arith.constant 0 : index
    %c0_0 = arith.constant 0 : index
    %c0_1 = arith.constant 0 : index
    %0 = vector.load %arg2[%c0, %c0_0, %c0_1] : memref<2x4x32xf32, #tpu.memory_space<vmem>>, vector<2x4x32xf32>
    %c0_2 = arith.constant 0 : index
    %1 = memref.load %arg1[%c0_2] : memref<64xf32, #tpu.memory_space<smem>>
    %2 = vector.extract_strided_slice %0 {offsets = [0, 0, 0], sizes = [1, 1, 32], strides = [1, 1, 1]} : vector<2x4x32xf32> to vector<1x1x32xf32>
    %3 = vector.shape_cast %2 : vector<1x1x32xf32> to vector<32xf32>
    %4 = vector.broadcast %1 : f32 to vector<32xf32>
    %5 = arith.mulf %4, %3 : vector<32xf32>
    %c16 = arith.constant 16 : index
    %6 = memref.load %arg1[%c16] : memref<64xf32, #tpu.memory_space<smem>>
    %7 = vector.extract_strided_slice %0 {offsets = [0, 1, 0], sizes = [1, 1, 32], strides = [1, 1, 1]} : vector<2x4x32xf32> to vector<1x1x32xf32>
    %8 = vector.shape_cast %7 : vector<1x1x32xf32> to vector<32xf32>
    %9 = vector.broadcast %6 : f32 to vector<32xf32>
    %10 = arith.mulf %9, %8 : vector<32xf32>
    %11 = arith.addf %5, %10 : vector<32xf32>
    %c32 = arith.constant 32 : index
    %12 = memref.load %arg1[%c32] : memref<64xf32, #tpu.memory_space<smem>>
    %13 = vector.extract_strided_slice %0 {offsets = [0, 2, 0], sizes = [1, 1, 32], strides = [1, 1, 1]} : vector<2x4x32xf32> to vector<1x1x32xf32>
    %14 = vector.shape_cast %13 : vector<1x1x32xf32> to vector<32xf32>
    %15 = vector.broadcast %12 : f32 to vector<32xf32>
    %16 = arith.mulf %15, %14 : vector<32xf32>
    %17 = arith.addf %11, %16 : vector<32xf32>
    %c48 = arith.constant 48 : index
    %18 = memref.load %arg1[%c48] : memref<64xf32, #tpu.memory_space<smem>>
    %19 = vector.extract_strided_slice %0 {offsets = [0, 3, 0], sizes = [1, 1, 32], strides = [1, 1, 1]} : vector<2x4x32xf32> to vector<1x1x32xf32>
    %20 = vector.shape_cast %19 : vector<1x1x32xf32> to vector<32xf32>
    %21 = vector.broadcast %18 : f32 to vector<32xf32>
    %22 = arith.mulf %21, %20 : vector<32xf32>
    %23 = arith.addf %17, %22 : vector<32xf32>
    %c0_3 = arith.constant 0 : index
    %c0_4 = arith.constant 0 : index
    %c0_5 = arith.constant 0 : index
    %24 = vector.load %arg6[%c0_3, %c0_4, %c0_5] : memref<2x8x32xf32, #tpu.memory_space<vmem>>, vector<1x1x32xf32>
    %25 = vector.shape_cast %24 : vector<1x1x32xf32> to vector<32xf32>
    %26 = vector.shape_cast %23 : vector<32xf32> to vector<1x1x32xf32>
    tpu.vector_store %arg6[%c0_3, %c0_4, %c0_5], %26 {strides = array<i32>} : memref<2x8x32xf32, #tpu.memory_space<vmem>>, vector<1x1x32xf32>,
    %c2 = arith.constant 2 : index
    %27 = memref.load %arg1[%c2] : memref<64xf32, #tpu.memory_space<smem>>
    %28 = vector.extract_strided_slice %0 {offsets = [0, 0, 0], sizes = [1, 1, 32], strides = [1, 1, 1]} : vector<2x4x32xf32> to vector<1x1x32xf32>
    %29 = vector.shape_cast %28 : vector<1x1x32xf32> to vector<32xf32>
    %30 = vector.broadcast %27 : f32 to vector<32xf32>
    %31 = arith.mulf %30, %29 : vector<32xf32>
    %c18 = arith.constant 18 : index
    %32 = memref.load %arg1[%c18] : memref<64xf32, #tpu.memory_space<smem>>
    %33 = vector.extract_strided_slice %0 {offsets = [0, 1, 0], sizes = [1, 1, 32], strides = [1, 1, 1]} : vector<2x4x32xf32> to vector<1x1x32xf32>
    %34 = vector.shape_cast %33 : vector<1x1x32xf32> to vector<32xf32>
    %35 = vector.broadcast %32 : f32 to vector<32xf32>
    %36 = arith.mulf %35, %34 : vector<32xf32>
    %37 = arith.addf %31, %36 : vector<32xf32>
    %c34 = arith.constant 34 : index
    %38 = memref.load %arg1[%c34] : memref<64xf32, #tpu.memory_space<smem>>
    %39 = vector.extract_strided_slice %0 {offsets = [0, 2, 0], sizes = [1, 1, 32], strides = [1, 1, 1]} : vector<2x4x32xf32> to vector<1x1x32xf32>
    %40 = vector.shape_cast %39 : vector<1x1x32xf32> to vector<32xf32>
    %41 = vector.broadcast %38 : f32 to vector<32xf32>
    %42 = arith.mulf %41, %40 : vector<32xf32>
    %43 = arith.addf %37, %42 : vector<32xf32>
    %c50 = arith.constant 50 : index
    %44 = memref.load %arg1[%c50] : memref<64xf32, #tpu.memory_space<smem>>
    %45 = vector.extract_strided_slice %0 {offsets = [0, 3, 0], sizes = [1, 1, 32], strides = [1, 1, 1]} : vector<2x4x32xf32> to vector<1x1x32xf32>
    %46 = vector.shape_cast %45 : vector<1x1x32xf32> to vector<32xf32>
    %47 = vector.broadcast %44 : f32 to vector<32xf32>
    %48 = arith.mulf %47, %46 : vector<32xf32>
    %49 = arith.addf %43, %48 : vector<32xf32>
    %c0_6 = arith.constant 0 : index
    %c1 = arith.constant 1 : index
    %c0_7 = arith.constant 0 : index
    %50 = vector.load %arg6[%c0_6, %c1, %c0_7] : memref<2x8x32xf32, #tpu.memory_space<vmem>>, vector<1x1x32xf32>
    %51 = vector.shape_cast %50 : vector<1x1x32xf32> to vector<32xf32>
    %52 = vector.shape_cast %49 : vector<32xf32> to vector<1x1x32xf32>
    tpu.vector_store %arg6[%c0_6, %c1, %c0_7], %52 {strides = array<i32>} : memref<2x8x32xf32, #tpu.memory_space<vmem>>, vector<1x1x32xf32>,
    %c4 = arith.constant 4 : index
    %53 = memref.load %arg1[%c4] : memref<64xf32, #tpu.memory_space<smem>>
    %54 = vector.extract_strided_slice %0 {offsets = [0, 0, 0], sizes = [1, 1, 32], strides = [1, 1, 1]} : vector<2x4x32xf32> to vector<1x1x32xf32>
    %55 = vector.shape_cast %54 : vector<1x1x32xf32> to vector<32xf32>
    %56 = vector.broadcast %53 : f32 to vector<32xf32>
    %57 = arith.mulf %56, %55 : vector<32xf32>
    %c20 = arith.constant 20 : index
    %58 = memref.load %arg1[%c20] : memref<64xf32, #tpu.memory_space<smem>>
    %59 = vector.extract_strided_slice %0 {offsets = [0, 1, 0], sizes = [1, 1, 32], strides = [1, 1, 1]} : vector<2x4x32xf32> to vector<1x1x32xf32>
    %60 = vector.shape_cast %59 : vector<1x1x32xf32> to vector<32xf32>
    %61 = vector.broadcast %58 : f32 to vector<32xf32>
    %62 = arith.mulf %61, %60 : vector<32xf32>
    %63 = arith.addf %57, %62 : vector<32xf32>
    %c36 = arith.constant 36 : index
    %64 = memref.load %arg1[%c36] : memref<64xf32, #tpu.memory_space<smem>>
    %65 = vector.extract_strided_slice %0 {offsets = [0, 2, 0], sizes = [1, 1, 32], strides = [1, 1, 1]} : vector<2x4x32xf32> to vector<1x1x32xf32>
    %66 = vector.shape_cast %65 : vector<1x1x32xf32> to vector<32xf32>
    %67 = vector.broadcast %64 : f32 to vector<32xf32>
    %68 = arith.mulf %67, %66 : vector<32xf32>
    %69 = arith.addf %63, %68 : vector<32xf32>
    %c52 = arith.constant 52 : index
    %70 = memref.load %arg1[%c52] : memref<64xf32, #tpu.memory_space<smem>>
    %71 = vector.extract_strided_slice %0 {offsets = [0, 3, 0], sizes = [1, 1, 32], strides = [1, 1, 1]} : vector<2x4x32xf32> to vector<1x1x32xf32>
    %72 = vector.shape_cast %71 : vector<1x1x32xf32> to vector<32xf32>
    %73 = vector.broadcast %70 : f32 to vector<32xf32>
    %74 = arith.mulf %73, %72 : vector<32xf32>
    %75 = arith.addf %69, %74 : vector<32xf32>
    %c0_8 = arith.constant 0 : index
    %c2_9 = arith.constant 2 : index
    %c0_10 = arith.constant 0 : index
    %76 = vector.load %arg6[%c0_8, %c2_9, %c0_10] : memref<2x8x32xf32, #tpu.memory_space<vmem>>, vector<1x1x32xf32>
    %77 = vector.shape_cast %76 : vector<1x1x32xf32> to vector<32xf32>
    %78 = vector.shape_cast %75 : vector<32xf32> to vector<1x1x32xf32>
    tpu.vector_store %arg6[%c0_8, %c2_9, %c0_10], %78 {strides = array<i32>} : memref<2x8x32xf32, #tpu.memory_space<vmem>>, vector<1x1x32xf32>,
    %c6 = arith.constant 6 : index
    %79 = memref.load %arg1[%c6] : memref<64xf32, #tpu.memory_space<smem>>
    %80 = vector.extract_strided_slice %0 {offsets = [0, 0, 0], sizes = [1, 1, 32], strides = [1, 1, 1]} : vector<2x4x32xf32> to vector<1x1x32xf32>
    %81 = vector.shape_cast %80 : vector<1x1x32xf32> to vector<32xf32>
    %82 = vector.broadcast %79 : f32 to vector<32xf32>
    %83 = arith.mulf %82, %81 : vector<32xf32>
    %c22 = arith.constant 22 : index
    %84 = memref.load %arg1[%c22] : memref<64xf32, #tpu.memory_space<smem>>
    %85 = vector.extract_strided_slice %0 {offsets = [0, 1, 0], sizes = [1, 1, 32], strides = [1, 1, 1]} : vector<2x4x32xf32> to vector<1x1x32xf32>
    %86 = vector.shape_cast %85 : vector<1x1x32xf32> to vector<32xf32>
    %87 = vector.broadcast %84 : f32 to vector<32xf32>
    %88 = arith.mulf %87, %86 : vector<32xf32>
    %89 = arith.addf %83, %88 : vector<32xf32>
    %c38 = arith.constant 38 : index
    %90 = memref.load %arg1[%c38] : memref<64xf32, #tpu.memory_space<smem>>
    %91 = vector.extract_strided_slice %0 {offsets = [0, 2, 0], sizes = [1, 1, 32], strides = [1, 1, 1]} : vector<2x4x32xf32> to vector<1x1x32xf32>
    %92 = vector.shape_cast %91 : vector<1x1x32xf32> to vector<32xf32>
    %93 = vector.broadcast %90 : f32 to vector<32xf32>
    %94 = arith.mulf %93, %92 : vector<32xf32>
    %95 = arith.addf %89, %94 : vector<32xf32>
    %c54 = arith.constant 54 : index
    %96 = memref.load %arg1[%c54] : memref<64xf32, #tpu.memory_space<smem>>
    %97 = vector.extract_strided_slice %0 {offsets = [0, 3, 0], sizes = [1, 1, 32], strides = [1, 1, 1]} : vector<2x4x32xf32> to vector<1x1x32xf32>
    %98 = vector.shape_cast %97 : vector<1x1x32xf32> to vector<32xf32>
    %99 = vector.broadcast %96 : f32 to vector<32xf32>
    %100 = arith.mulf %99, %98 : vector<32xf32>
    %101 = arith.addf %95, %100 : vector<32xf32>
    %c0_11 = arith.constant 0 : index
    %c3 = arith.constant 3 : index
    %c0_12 = arith.constant 0 : index
    %102 = vector.load %arg6[%c0_11, %c3, %c0_12] : memref<2x8x32xf32, #tpu.memory_space<vmem>>, vector<1x1x32xf32>
    %103 = vector.shape_cast %102 : vector<1x1x32xf32> to vector<32xf32>
    %104 = vector.shape_cast %101 : vector<32xf32> to vector<1x1x32xf32>
    tpu.vector_store %arg6[%c0_11, %c3, %c0_12], %104 {strides = array<i32>} : memref<2x8x32xf32, #tpu.memory_space<vmem>>, vector<1x1x32xf32>,
    %c8 = arith.constant 8 : index
    %105 = memref.load %arg1[%c8] : memref<64xf32, #tpu.memory_space<smem>>
    %106 = vector.extract_strided_slice %0 {offsets = [0, 0, 0], sizes = [1, 1, 32], strides = [1, 1, 1]} : vector<2x4x32xf32> to vector<1x1x32xf32>
    %107 = vector.shape_cast %106 : vector<1x1x32xf32> to vector<32xf32>
    %108 = vector.broadcast %105 : f32 to vector<32xf32>
    %109 = arith.mulf %108, %107 : vector<32xf32>
    %c24 = arith.constant 24 : index
    %110 = memref.load %arg1[%c24] : memref<64xf32, #tpu.memory_space<smem>>
    %111 = vector.extract_strided_slice %0 {offsets = [0, 1, 0], sizes = [1, 1, 32], strides = [1, 1, 1]} : vector<2x4x32xf32> to vector<1x1x32xf32>
    %112 = vector.shape_cast %111 : vector<1x1x32xf32> to vector<32xf32>
    %113 = vector.broadcast %110 : f32 to vector<32xf32>
    %114 = arith.mulf %113, %112 : vector<32xf32>
    %115 = arith.addf %109, %114 : vector<32xf32>
    %c40 = arith.constant 40 : index
    %116 = memref.load %arg1[%c40] : memref<64xf32, #tpu.memory_space<smem>>
    %117 = vector.extract_strided_slice %0 {offsets = [0, 2, 0], sizes = [1, 1, 32], strides = [1, 1, 1]} : vector<2x4x32xf32> to vector<1x1x32xf32>
    %118 = vector.shape_cast %117 : vector<1x1x32xf32> to vector<32xf32>
    %119 = vector.broadcast %116 : f32 to vector<32xf32>
    %120 = arith.mulf %119, %118 : vector<32xf32>
    %121 = arith.addf %115, %120 : vector<32xf32>
    %c56 = arith.constant 56 : index
    %122 = memref.load %arg1[%c56] : memref<64xf32, #tpu.memory_space<smem>>
    %123 = vector.extract_strided_slice %0 {offsets = [0, 3, 0], sizes = [1, 1, 32], strides = [1, 1, 1]} : vector<2x4x32xf32> to vector<1x1x32xf32>
    %124 = vector.shape_cast %123 : vector<1x1x32xf32> to vector<32xf32>
    %125 = vector.broadcast %122 : f32 to vector<32xf32>
    %126 = arith.mulf %125, %124 : vector<32xf32>
    %127 = arith.addf %121, %126 : vector<32xf32>
    %c0_13 = arith.constant 0 : index
    %c4_14 = arith.constant 4 : index
    %c0_15 = arith.constant 0 : index
    %128 = vector.load %arg6[%c0_13, %c4_14, %c0_15] : memref<2x8x32xf32, #tpu.memory_space<vmem>>, vector<1x1x32xf32>
    %129 = vector.shape_cast %128 : vector<1x1x32xf32> to vector<32xf32>
    %130 = vector.shape_cast %127 : vector<32xf32> to vector<1x1x32xf32>
    tpu.vector_store %arg6[%c0_13, %c4_14, %c0_15], %130 {strides = array<i32>} : memref<2x8x32xf32, #tpu.memory_space<vmem>>, vector<1x1x32xf32>,
    %c10 = arith.constant 10 : index
    %131 = memref.load %arg1[%c10] : memref<64xf32, #tpu.memory_space<smem>>
    %132 = vector.extract_strided_slice %0 {offsets = [0, 0, 0], sizes = [1, 1, 32], strides = [1, 1, 1]} : vector<2x4x32xf32> to vector<1x1x32xf32>
    %133 = vector.shape_cast %132 : vector<1x1x32xf32> to vector<32xf32>
    %134 = vector.broadcast %131 : f32 to vector<32xf32>
    %135 = arith.mulf %134, %133 : vector<32xf32>
    %c26 = arith.constant 26 : index
    %136 = memref.load %arg1[%c26] : memref<64xf32, #tpu.memory_space<smem>>
    %137 = vector.extract_strided_slice %0 {offsets = [0, 1, 0], sizes = [1, 1, 32], strides = [1, 1, 1]} : vector<2x4x32xf32> to vector<1x1x32xf32>
    %138 = vector.shape_cast %137 : vector<1x1x32xf32> to vector<32xf32>
    %139 = vector.broadcast %136 : f32 to vector<32xf32>
    %140 = arith.mulf %139, %138 : vector<32xf32>
    %141 = arith.addf %135, %140 : vector<32xf32>
    %c42 = arith.constant 42 : index
    %142 = memref.load %arg1[%c42] : memref<64xf32, #tpu.memory_space<smem>>
    %143 = vector.extract_strided_slice %0 {offsets = [0, 2, 0], sizes = [1, 1, 32], strides = [1, 1, 1]} : vector<2x4x32xf32> to vector<1x1x32xf32>
    %144 = vector.shape_cast %143 : vector<1x1x32xf32> to vector<32xf32>
    %145 = vector.broadcast %142 : f32 to vector<32xf32>
    %146 = arith.mulf %145, %144 : vector<32xf32>
    %147 = arith.addf %141, %146 : vector<32xf32>
    %c58 = arith.constant 58 : index
    %148 = memref.load %arg1[%c58] : memref<64xf32, #tpu.memory_space<smem>>
    %149 = vector.extract_strided_slice %0 {offsets = [0, 3, 0], sizes = [1, 1, 32], strides = [1, 1, 1]} : vector<2x4x32xf32> to vector<1x1x32xf32>
    %150 = vector.shape_cast %149 : vector<1x1x32xf32> to vector<32xf32>
    %151 = vector.broadcast %148 : f32 to vector<32xf32>
    %152 = arith.mulf %151, %150 : vector<32xf32>
    %153 = arith.addf %147, %152 : vector<32xf32>
    %c0_16 = arith.constant 0 : index
    %c5 = arith.constant 5 : index
    %c0_17 = arith.constant 0 : index
    %154 = vector.load %arg6[%c0_16, %c5, %c0_17] : memref<2x8x32xf32, #tpu.memory_space<vmem>>, vector<1x1x32xf32>
    %155 = vector.shape_cast %154 : vector<1x1x32xf32> to vector<32xf32>
    %156 = vector.shape_cast %153 : vector<32xf32> to vector<1x1x32xf32>
    tpu.vector_store %arg6[%c0_16, %c5, %c0_17], %156 {strides = array<i32>} : memref<2x8x32xf32, #tpu.memory_space<vmem>>, vector<1x1x32xf32>,
    %c12 = arith.constant 12 : index
    %157 = memref.load %arg1[%c12] : memref<64xf32, #tpu.memory_space<smem>>
    %158 = vector.extract_strided_slice %0 {offsets = [0, 0, 0], sizes = [1, 1, 32], strides = [1, 1, 1]} : vector<2x4x32xf32> to vector<1x1x32xf32>
    %159 = vector.shape_cast %158 : vector<1x1x32xf32> to vector<32xf32>
    %160 = vector.broadcast %157 : f32 to vector<32xf32>
    %161 = arith.mulf %160, %159 : vector<32xf32>
    %c28 = arith.constant 28 : index
    %162 = memref.load %arg1[%c28] : memref<64xf32, #tpu.memory_space<smem>>
    %163 = vector.extract_strided_slice %0 {offsets = [0, 1, 0], sizes = [1, 1, 32], strides = [1, 1, 1]} : vector<2x4x32xf32> to vector<1x1x32xf32>
    %164 = vector.shape_cast %163 : vector<1x1x32xf32> to vector<32xf32>
    %165 = vector.broadcast %162 : f32 to vector<32xf32>
    %166 = arith.mulf %165, %164 : vector<32xf32>
    %167 = arith.addf %161, %166 : vector<32xf32>
    %c44 = arith.constant 44 : index
    %168 = memref.load %arg1[%c44] : memref<64xf32, #tpu.memory_space<smem>>
    %169 = vector.extract_strided_slice %0 {offsets = [0, 2, 0], sizes = [1, 1, 32], strides = [1, 1, 1]} : vector<2x4x32xf32> to vector<1x1x32xf32>
    %170 = vector.shape_cast %169 : vector<1x1x32xf32> to vector<32xf32>
    %171 = vector.broadcast %168 : f32 to vector<32xf32>
    %172 = arith.mulf %171, %170 : vector<32xf32>
    %173 = arith.addf %167, %172 : vector<32xf32>
    %c60 = arith.constant 60 : index
    %174 = memref.load %arg1[%c60] : memref<64xf32, #tpu.memory_space<smem>>
    %175 = vector.extract_strided_slice %0 {offsets = [0, 3, 0], sizes = [1, 1, 32], strides = [1, 1, 1]} : vector<2x4x32xf32> to vector<1x1x32xf32>
    %176 = vector.shape_cast %175 : vector<1x1x32xf32> to vector<32xf32>
    %177 = vector.broadcast %174 : f32 to vector<32xf32>
    %178 = arith.mulf %177, %176 : vector<32xf32>
    %179 = arith.addf %173, %178 : vector<32xf32>
    %c0_18 = arith.constant 0 : index
    %c6_19 = arith.constant 6 : index
    %c0_20 = arith.constant 0 : index
    %180 = vector.load %arg6[%c0_18, %c6_19, %c0_20] : memref<2x8x32xf32, #tpu.memory_space<vmem>>, vector<1x1x32xf32>
    %181 = vector.shape_cast %180 : vector<1x1x32xf32> to vector<32xf32>
    %182 = vector.shape_cast %179 : vector<32xf32> to vector<1x1x32xf32>
    tpu.vector_store %arg6[%c0_18, %c6_19, %c0_20], %182 {strides = array<i32>} : memref<2x8x32xf32, #tpu.memory_space<vmem>>, vector<1x1x32xf32>,
    %c14 = arith.constant 14 : index
    %183 = memref.load %arg1[%c14] : memref<64xf32, #tpu.memory_space<smem>>
    %184 = vector.extract_strided_slice %0 {offsets = [0, 0, 0], sizes = [1, 1, 32], strides = [1, 1, 1]} : vector<2x4x32xf32> to vector<1x1x32xf32>
    %185 = vector.shape_cast %184 : vector<1x1x32xf32> to vector<32xf32>
    %186 = vector.broadcast %183 : f32 to vector<32xf32>
    %187 = arith.mulf %186, %185 : vector<32xf32>
    %c30 = arith.constant 30 : index
    %188 = memref.load %arg1[%c30] : memref<64xf32, #tpu.memory_space<smem>>
    %189 = vector.extract_strided_slice %0 {offsets = [0, 1, 0], sizes = [1, 1, 32], strides = [1, 1, 1]} : vector<2x4x32xf32> to vector<1x1x32xf32>
    %190 = vector.shape_cast %189 : vector<1x1x32xf32> to vector<32xf32>
    %191 = vector.broadcast %188 : f32 to vector<32xf32>
    %192 = arith.mulf %191, %190 : vector<32xf32>
    %193 = arith.addf %187, %192 : vector<32xf32>
    %c46 = arith.constant 46 : index
    %194 = memref.load %arg1[%c46] : memref<64xf32, #tpu.memory_space<smem>>
    %195 = vector.extract_strided_slice %0 {offsets = [0, 2, 0], sizes = [1, 1, 32], strides = [1, 1, 1]} : vector<2x4x32xf32> to vector<1x1x32xf32>
    %196 = vector.shape_cast %195 : vector<1x1x32xf32> to vector<32xf32>
    %197 = vector.broadcast %194 : f32 to vector<32xf32>
    %198 = arith.mulf %197, %196 : vector<32xf32>
    %199 = arith.addf %193, %198 : vector<32xf32>
    %c62 = arith.constant 62 : index
    %200 = memref.load %arg1[%c62] : memref<64xf32, #tpu.memory_space<smem>>
    %201 = vector.extract_strided_slice %0 {offsets = [0, 3, 0], sizes = [1, 1, 32], strides = [1, 1, 1]} : vector<2x4x32xf32> to vector<1x1x32xf32>
    %202 = vector.shape_cast %201 : vector<1x1x32xf32> to vector<32xf32>
    %203 = vector.broadcast %200 : f32 to vector<32xf32>
    %204 = arith.mulf %203, %202 : vector<32xf32>
    %205 = arith.addf %199, %204 : vector<32xf32>
    %c0_21 = arith.constant 0 : index
    %c7 = arith.constant 7 : index
    %c0_22 = arith.constant 0 : index
    %206 = vector.load %arg6[%c0_21, %c7, %c0_22] : memref<2x8x32xf32, #tpu.memory_space<vmem>>, vector<1x1x32xf32>
    %207 = vector.shape_cast %206 : vector<1x1x32xf32> to vector<32xf32>
    %208 = vector.shape_cast %205 : vector<32xf32> to vector<1x1x32xf32>
    tpu.vector_store %arg6[%c0_21, %c7, %c0_22], %208 {strides = array<i32>} : memref<2x8x32xf32, #tpu.memory_space<vmem>>, vector<1x1x32xf32>,
    %c1_23 = arith.constant 1 : index
    %209 = memref.load %arg1[%c1_23] : memref<64xf32, #tpu.memory_space<smem>>
    %210 = vector.extract_strided_slice %0 {offsets = [1, 0, 0], sizes = [1, 1, 32], strides = [1, 1, 1]} : vector<2x4x32xf32> to vector<1x1x32xf32>
    %211 = vector.shape_cast %210 : vector<1x1x32xf32> to vector<32xf32>
    %212 = vector.broadcast %209 : f32 to vector<32xf32>
    %213 = arith.mulf %212, %211 : vector<32xf32>
    %c17 = arith.constant 17 : index
    %214 = memref.load %arg1[%c17] : memref<64xf32, #tpu.memory_space<smem>>
    %215 = vector.extract_strided_slice %0 {offsets = [1, 1, 0], sizes = [1, 1, 32], strides = [1, 1, 1]} : vector<2x4x32xf32> to vector<1x1x32xf32>
    %216 = vector.shape_cast %215 : vector<1x1x32xf32> to vector<32xf32>
    %217 = vector.broadcast %214 : f32 to vector<32xf32>
    %218 = arith.mulf %217, %216 : vector<32xf32>
    %219 = arith.addf %213, %218 : vector<32xf32>
    %c33 = arith.constant 33 : index
    %220 = memref.load %arg1[%c33] : memref<64xf32, #tpu.memory_space<smem>>
    %221 = vector.extract_strided_slice %0 {offsets = [1, 2, 0], sizes = [1, 1, 32], strides = [1, 1, 1]} : vector<2x4x32xf32> to vector<1x1x32xf32>
    %222 = vector.shape_cast %221 : vector<1x1x32xf32> to vector<32xf32>
    %223 = vector.broadcast %220 : f32 to vector<32xf32>
    %224 = arith.mulf %223, %222 : vector<32xf32>
    %225 = arith.addf %219, %224 : vector<32xf32>
    %c49 = arith.constant 49 : index
    %226 = memref.load %arg1[%c49] : memref<64xf32, #tpu.memory_space<smem>>
    %227 = vector.extract_strided_slice %0 {offsets = [1, 3, 0], sizes = [1, 1, 32], strides = [1, 1, 1]} : vector<2x4x32xf32> to vector<1x1x32xf32>
    %228 = vector.shape_cast %227 : vector<1x1x32xf32> to vector<32xf32>
    %229 = vector.broadcast %226 : f32 to vector<32xf32>
    %230 = arith.mulf %229, %228 : vector<32xf32>
    %231 = arith.addf %225, %230 : vector<32xf32>
    %c1_24 = arith.constant 1 : index
    %c0_25 = arith.constant 0 : index
    %c0_26 = arith.constant 0 : index
    %232 = vector.load %arg6[%c1_24, %c0_25, %c0_26] : memref<2x8x32xf32, #tpu.memory_space<vmem>>, vector<1x1x32xf32>
    %233 = vector.shape_cast %232 : vector<1x1x32xf32> to vector<32xf32>
    %234 = vector.shape_cast %231 : vector<32xf32> to vector<1x1x32xf32>
    tpu.vector_store %arg6[%c1_24, %c0_25, %c0_26], %234 {strides = array<i32>} : memref<2x8x32xf32, #tpu.memory_space<vmem>>, vector<1x1x32xf32>,
    %c3_27 = arith.constant 3 : index
    %235 = memref.load %arg1[%c3_27] : memref<64xf32, #tpu.memory_space<smem>>
    %236 = vector.extract_strided_slice %0 {offsets = [1, 0, 0], sizes = [1, 1, 32], strides = [1, 1, 1]} : vector<2x4x32xf32> to vector<1x1x32xf32>
    %237 = vector.shape_cast %236 : vector<1x1x32xf32> to vector<32xf32>
    %238 = vector.broadcast %235 : f32 to vector<32xf32>
    %239 = arith.mulf %238, %237 : vector<32xf32>
    %c19 = arith.constant 19 : index
    %240 = memref.load %arg1[%c19] : memref<64xf32, #tpu.memory_space<smem>>
    %241 = vector.extract_strided_slice %0 {offsets = [1, 1, 0], sizes = [1, 1, 32], strides = [1, 1, 1]} : vector<2x4x32xf32> to vector<1x1x32xf32>
    %242 = vector.shape_cast %241 : vector<1x1x32xf32> to vector<32xf32>
    %243 = vector.broadcast %240 : f32 to vector<32xf32>
    %244 = arith.mulf %243, %242 : vector<32xf32>
    %245 = arith.addf %239, %244 : vector<32xf32>
    %c35 = arith.constant 35 : index
    %246 = memref.load %arg1[%c35] : memref<64xf32, #tpu.memory_space<smem>>
    %247 = vector.extract_strided_slice %0 {offsets = [1, 2, 0], sizes = [1, 1, 32], strides = [1, 1, 1]} : vector<2x4x32xf32> to vector<1x1x32xf32>
    %248 = vector.shape_cast %247 : vector<1x1x32xf32> to vector<32xf32>
    %249 = vector.broadcast %246 : f32 to vector<32xf32>
    %250 = arith.mulf %249, %248 : vector<32xf32>
    %251 = arith.addf %245, %250 : vector<32xf32>
    %c51 = arith.constant 51 : index
    %252 = memref.load %arg1[%c51] : memref<64xf32, #tpu.memory_space<smem>>
    %253 = vector.extract_strided_slice %0 {offsets = [1, 3, 0], sizes = [1, 1, 32], strides = [1, 1, 1]} : vector<2x4x32xf32> to vector<1x1x32xf32>
    %254 = vector.shape_cast %253 : vector<1x1x32xf32> to vector<32xf32>
    %255 = vector.broadcast %252 : f32 to vector<32xf32>
    %256 = arith.mulf %255, %254 : vector<32xf32>
    %257 = arith.addf %251, %256 : vector<32xf32>
    %c1_28 = arith.constant 1 : index
    %c1_29 = arith.constant 1 : index
    %c0_30 = arith.constant 0 : index
    %258 = vector.load %arg6[%c1_28, %c1_29, %c0_30] : memref<2x8x32xf32, #tpu.memory_space<vmem>>, vector<1x1x32xf32>
    %259 = vector.shape_cast %258 : vector<1x1x32xf32> to vector<32xf32>
    %260 = vector.shape_cast %257 : vector<32xf32> to vector<1x1x32xf32>
    tpu.vector_store %arg6[%c1_28, %c1_29, %c0_30], %260 {strides = array<i32>} : memref<2x8x32xf32, #tpu.memory_space<vmem>>, vector<1x1x32xf32>,
    %c5_31 = arith.constant 5 : index
    %261 = memref.load %arg1[%c5_31] : memref<64xf32, #tpu.memory_space<smem>>
    %262 = vector.extract_strided_slice %0 {offsets = [1, 0, 0], sizes = [1, 1, 32], strides = [1, 1, 1]} : vector<2x4x32xf32> to vector<1x1x32xf32>
    %263 = vector.shape_cast %262 : vector<1x1x32xf32> to vector<32xf32>
    %264 = vector.broadcast %261 : f32 to vector<32xf32>
    %265 = arith.mulf %264, %263 : vector<32xf32>
    %c21 = arith.constant 21 : index
    %266 = memref.load %arg1[%c21] : memref<64xf32, #tpu.memory_space<smem>>
    %267 = vector.extract_strided_slice %0 {offsets = [1, 1, 0], sizes = [1, 1, 32], strides = [1, 1, 1]} : vector<2x4x32xf32> to vector<1x1x32xf32>
    %268 = vector.shape_cast %267 : vector<1x1x32xf32> to vector<32xf32>
    %269 = vector.broadcast %266 : f32 to vector<32xf32>
    %270 = arith.mulf %269, %268 : vector<32xf32>
    %271 = arith.addf %265, %270 : vector<32xf32>
    %c37 = arith.constant 37 : index
    %272 = memref.load %arg1[%c37] : memref<64xf32, #tpu.memory_space<smem>>
    %273 = vector.extract_strided_slice %0 {offsets = [1, 2, 0], sizes = [1, 1, 32], strides = [1, 1, 1]} : vector<2x4x32xf32> to vector<1x1x32xf32>
    %274 = vector.shape_cast %273 : vector<1x1x32xf32> to vector<32xf32>
    %275 = vector.broadcast %272 : f32 to vector<32xf32>
    %276 = arith.mulf %275, %274 : vector<32xf32>
    %277 = arith.addf %271, %276 : vector<32xf32>
    %c53 = arith.constant 53 : index
    %278 = memref.load %arg1[%c53] : memref<64xf32, #tpu.memory_space<smem>>
    %279 = vector.extract_strided_slice %0 {offsets = [1, 3, 0], sizes = [1, 1, 32], strides = [1, 1, 1]} : vector<2x4x32xf32> to vector<1x1x32xf32>
    %280 = vector.shape_cast %279 : vector<1x1x32xf32> to vector<32xf32>
    %281 = vector.broadcast %278 : f32 to vector<32xf32>
    %282 = arith.mulf %281, %280 : vector<32xf32>
    %283 = arith.addf %277, %282 : vector<32xf32>
    %c1_32 = arith.constant 1 : index
    %c2_33 = arith.constant 2 : index
    %c0_34 = arith.constant 0 : index
    %284 = vector.load %arg6[%c1_32, %c2_33, %c0_34] : memref<2x8x32xf32, #tpu.memory_space<vmem>>, vector<1x1x32xf32>
    %285 = vector.shape_cast %284 : vector<1x1x32xf32> to vector<32xf32>
    %286 = vector.shape_cast %283 : vector<32xf32> to vector<1x1x32xf32>
    tpu.vector_store %arg6[%c1_32, %c2_33, %c0_34], %286 {strides = array<i32>} : memref<2x8x32xf32, #tpu.memory_space<vmem>>, vector<1x1x32xf32>,
    %c7_35 = arith.constant 7 : index
    %287 = memref.load %arg1[%c7_35] : memref<64xf32, #tpu.memory_space<smem>>
    %288 = vector.extract_strided_slice %0 {offsets = [1, 0, 0], sizes = [1, 1, 32], strides = [1, 1, 1]} : vector<2x4x32xf32> to vector<1x1x32xf32>
    %289 = vector.shape_cast %288 : vector<1x1x32xf32> to vector<32xf32>
    %290 = vector.broadcast %287 : f32 to vector<32xf32>
    %291 = arith.mulf %290, %289 : vector<32xf32>
    %c23 = arith.constant 23 : index
    %292 = memref.load %arg1[%c23] : memref<64xf32, #tpu.memory_space<smem>>
    %293 = vector.extract_strided_slice %0 {offsets = [1, 1, 0], sizes = [1, 1, 32], strides = [1, 1, 1]} : vector<2x4x32xf32> to vector<1x1x32xf32>
    %294 = vector.shape_cast %293 : vector<1x1x32xf32> to vector<32xf32>
    %295 = vector.broadcast %292 : f32 to vector<32xf32>
    %296 = arith.mulf %295, %294 : vector<32xf32>
    %297 = arith.addf %291, %296 : vector<32xf32>
    %c39 = arith.constant 39 : index
    %298 = memref.load %arg1[%c39] : memref<64xf32, #tpu.memory_space<smem>>
    %299 = vector.extract_strided_slice %0 {offsets = [1, 2, 0], sizes = [1, 1, 32], strides = [1, 1, 1]} : vector<2x4x32xf32> to vector<1x1x32xf32>
    %300 = vector.shape_cast %299 : vector<1x1x32xf32> to vector<32xf32>
    %301 = vector.broadcast %298 : f32 to vector<32xf32>
    %302 = arith.mulf %301, %300 : vector<32xf32>
    %303 = arith.addf %297, %302 : vector<32xf32>
    %c55 = arith.constant 55 : index
    %304 = memref.load %arg1[%c55] : memref<64xf32, #tpu.memory_space<smem>>
    %305 = vector.extract_strided_slice %0 {offsets = [1, 3, 0], sizes = [1, 1, 32], strides = [1, 1, 1]} : vector<2x4x32xf32> to vector<1x1x32xf32>
    %306 = vector.shape_cast %305 : vector<1x1x32xf32> to vector<32xf32>
    %307 = vector.broadcast %304 : f32 to vector<32xf32>
    %308 = arith.mulf %307, %306 : vector<32xf32>
    %309 = arith.addf %303, %308 : vector<32xf32>
    %c1_36 = arith.constant 1 : index
    %c3_37 = arith.constant 3 : index
    %c0_38 = arith.constant 0 : index
    %310 = vector.load %arg6[%c1_36, %c3_37, %c0_38] : memref<2x8x32xf32, #tpu.memory_space<vmem>>, vector<1x1x32xf32>
    %311 = vector.shape_cast %310 : vector<1x1x32xf32> to vector<32xf32>
    %312 = vector.shape_cast %309 : vector<32xf32> to vector<1x1x32xf32>
    tpu.vector_store %arg6[%c1_36, %c3_37, %c0_38], %312 {strides = array<i32>} : memref<2x8x32xf32, #tpu.memory_space<vmem>>, vector<1x1x32xf32>,
    %c9 = arith.constant 9 : index
    %313 = memref.load %arg1[%c9] : memref<64xf32, #tpu.memory_space<smem>>
    %314 = vector.extract_strided_slice %0 {offsets = [1, 0, 0], sizes = [1, 1, 32], strides = [1, 1, 1]} : vector<2x4x32xf32> to vector<1x1x32xf32>
    %315 = vector.shape_cast %314 : vector<1x1x32xf32> to vector<32xf32>
    %316 = vector.broadcast %313 : f32 to vector<32xf32>
    %317 = arith.mulf %316, %315 : vector<32xf32>
    %c25 = arith.constant 25 : index
    %318 = memref.load %arg1[%c25] : memref<64xf32, #tpu.memory_space<smem>>
    %319 = vector.extract_strided_slice %0 {offsets = [1, 1, 0], sizes = [1, 1, 32], strides = [1, 1, 1]} : vector<2x4x32xf32> to vector<1x1x32xf32>
    %320 = vector.shape_cast %319 : vector<1x1x32xf32> to vector<32xf32>
    %321 = vector.broadcast %318 : f32 to vector<32xf32>
    %322 = arith.mulf %321, %320 : vector<32xf32>
    %323 = arith.addf %317, %322 : vector<32xf32>
    %c41 = arith.constant 41 : index
    %324 = memref.load %arg1[%c41] : memref<64xf32, #tpu.memory_space<smem>>
    %325 = vector.extract_strided_slice %0 {offsets = [1, 2, 0], sizes = [1, 1, 32], strides = [1, 1, 1]} : vector<2x4x32xf32> to vector<1x1x32xf32>
    %326 = vector.shape_cast %325 : vector<1x1x32xf32> to vector<32xf32>
    %327 = vector.broadcast %324 : f32 to vector<32xf32>
    %328 = arith.mulf %327, %326 : vector<32xf32>
    %329 = arith.addf %323, %328 : vector<32xf32>
    %c57 = arith.constant 57 : index
    %330 = memref.load %arg1[%c57] : memref<64xf32, #tpu.memory_space<smem>>
    %331 = vector.extract_strided_slice %0 {offsets = [1, 3, 0], sizes = [1, 1, 32], strides = [1, 1, 1]} : vector<2x4x32xf32> to vector<1x1x32xf32>
    %332 = vector.shape_cast %331 : vector<1x1x32xf32> to vector<32xf32>
    %333 = vector.broadcast %330 : f32 to vector<32xf32>
    %334 = arith.mulf %333, %332 : vector<32xf32>
    %335 = arith.addf %329, %334 : vector<32xf32>
    %c1_39 = arith.constant 1 : index
    %c4_40 = arith.constant 4 : index
    %c0_41 = arith.constant 0 : index
    %336 = vector.load %arg6[%c1_39, %c4_40, %c0_41] : memref<2x8x32xf32, #tpu.memory_space<vmem>>, vector<1x1x32xf32>
    %337 = vector.shape_cast %336 : vector<1x1x32xf32> to vector<32xf32>
    %338 = vector.shape_cast %335 : vector<32xf32> to vector<1x1x32xf32>
    tpu.vector_store %arg6[%c1_39, %c4_40, %c0_41], %338 {strides = array<i32>} : memref<2x8x32xf32, #tpu.memory_space<vmem>>, vector<1x1x32xf32>,
    %c11 = arith.constant 11 : index
    %339 = memref.load %arg1[%c11] : memref<64xf32, #tpu.memory_space<smem>>
    %340 = vector.extract_strided_slice %0 {offsets = [1, 0, 0], sizes = [1, 1, 32], strides = [1, 1, 1]} : vector<2x4x32xf32> to vector<1x1x32xf32>
    %341 = vector.shape_cast %340 : vector<1x1x32xf32> to vector<32xf32>
    %342 = vector.broadcast %339 : f32 to vector<32xf32>
    %343 = arith.mulf %342, %341 : vector<32xf32>
    %c27 = arith.constant 27 : index
    %344 = memref.load %arg1[%c27] : memref<64xf32, #tpu.memory_space<smem>>
    %345 = vector.extract_strided_slice %0 {offsets = [1, 1, 0], sizes = [1, 1, 32], strides = [1, 1, 1]} : vector<2x4x32xf32> to vector<1x1x32xf32>
    %346 = vector.shape_cast %345 : vector<1x1x32xf32> to vector<32xf32>
    %347 = vector.broadcast %344 : f32 to vector<32xf32>
    %348 = arith.mulf %347, %346 : vector<32xf32>
    %349 = arith.addf %343, %348 : vector<32xf32>
    %c43 = arith.constant 43 : index
    %350 = memref.load %arg1[%c43] : memref<64xf32, #tpu.memory_space<smem>>
    %351 = vector.extract_strided_slice %0 {offsets = [1, 2, 0], sizes = [1, 1, 32], strides = [1, 1, 1]} : vector<2x4x32xf32> to vector<1x1x32xf32>
    %352 = vector.shape_cast %351 : vector<1x1x32xf32> to vector<32xf32>
    %353 = vector.broadcast %350 : f32 to vector<32xf32>
    %354 = arith.mulf %353, %352 : vector<32xf32>
    %355 = arith.addf %349, %354 : vector<32xf32>
    %c59 = arith.constant 59 : index
    %356 = memref.load %arg1[%c59] : memref<64xf32, #tpu.memory_space<smem>>
    %357 = vector.extract_strided_slice %0 {offsets = [1, 3, 0], sizes = [1, 1, 32], strides = [1, 1, 1]} : vector<2x4x32xf32> to vector<1x1x32xf32>
    %358 = vector.shape_cast %357 : vector<1x1x32xf32> to vector<32xf32>
    %359 = vector.broadcast %356 : f32 to vector<32xf32>
    %360 = arith.mulf %359, %358 : vector<32xf32>
    %361 = arith.addf %355, %360 : vector<32xf32>
    %c1_42 = arith.constant 1 : index
    %c5_43 = arith.constant 5 : index
    %c0_44 = arith.constant 0 : index
    %362 = vector.load %arg6[%c1_42, %c5_43, %c0_44] : memref<2x8x32xf32, #tpu.memory_space<vmem>>, vector<1x1x32xf32>
    %363 = vector.shape_cast %362 : vector<1x1x32xf32> to vector<32xf32>
    %364 = vector.shape_cast %361 : vector<32xf32> to vector<1x1x32xf32>
    tpu.vector_store %arg6[%c1_42, %c5_43, %c0_44], %364 {strides = array<i32>} : memref<2x8x32xf32, #tpu.memory_space<vmem>>, vector<1x1x32xf32>,
    %c13 = arith.constant 13 : index
    %365 = memref.load %arg1[%c13] : memref<64xf32, #tpu.memory_space<smem>>
    %366 = vector.extract_strided_slice %0 {offsets = [1, 0, 0], sizes = [1, 1, 32], strides = [1, 1, 1]} : vector<2x4x32xf32> to vector<1x1x32xf32>
    %367 = vector.shape_cast %366 : vector<1x1x32xf32> to vector<32xf32>
    %368 = vector.broadcast %365 : f32 to vector<32xf32>
    %369 = arith.mulf %368, %367 : vector<32xf32>
    %c29 = arith.constant 29 : index
    %370 = memref.load %arg1[%c29] : memref<64xf32, #tpu.memory_space<smem>>
    %371 = vector.extract_strided_slice %0 {offsets = [1, 1, 0], sizes = [1, 1, 32], strides = [1, 1, 1]} : vector<2x4x32xf32> to vector<1x1x32xf32>
    %372 = vector.shape_cast %371 : vector<1x1x32xf32> to vector<32xf32>
    %373 = vector.broadcast %370 : f32 to vector<32xf32>
    %374 = arith.mulf %373, %372 : vector<32xf32>
    %375 = arith.addf %369, %374 : vector<32xf32>
    %c45 = arith.constant 45 : index
    %376 = memref.load %arg1[%c45] : memref<64xf32, #tpu.memory_space<smem>>
    %377 = vector.extract_strided_slice %0 {offsets = [1, 2, 0], sizes = [1, 1, 32], strides = [1, 1, 1]} : vector<2x4x32xf32> to vector<1x1x32xf32>
    %378 = vector.shape_cast %377 : vector<1x1x32xf32> to vector<32xf32>
    %379 = vector.broadcast %376 : f32 to vector<32xf32>
    %380 = arith.mulf %379, %378 : vector<32xf32>
    %381 = arith.addf %375, %380 : vector<32xf32>
    %c61 = arith.constant 61 : index
    %382 = memref.load %arg1[%c61] : memref<64xf32, #tpu.memory_space<smem>>
    %383 = vector.extract_strided_slice %0 {offsets = [1, 3, 0], sizes = [1, 1, 32], strides = [1, 1, 1]} : vector<2x4x32xf32> to vector<1x1x32xf32>
    %384 = vector.shape_cast %383 : vector<1x1x32xf32> to vector<32xf32>
    %385 = vector.broadcast %382 : f32 to vector<32xf32>
    %386 = arith.mulf %385, %384 : vector<32xf32>
    %387 = arith.addf %381, %386 : vector<32xf32>
    %c1_45 = arith.constant 1 : index
    %c6_46 = arith.constant 6 : index
    %c0_47 = arith.constant 0 : index
    %388 = vector.load %arg6[%c1_45, %c6_46, %c0_47] : memref<2x8x32xf32, #tpu.memory_space<vmem>>, vector<1x1x32xf32>
    %389 = vector.shape_cast %388 : vector<1x1x32xf32> to vector<32xf32>
    %390 = vector.shape_cast %387 : vector<32xf32> to vector<1x1x32xf32>
    tpu.vector_store %arg6[%c1_45, %c6_46, %c0_47], %390 {strides = array<i32>} : memref<2x8x32xf32, #tpu.memory_space<vmem>>, vector<1x1x32xf32>,
    %c15 = arith.constant 15 : index
    %391 = memref.load %arg1[%c15] : memref<64xf32, #tpu.memory_space<smem>>
    %392 = vector.extract_strided_slice %0 {offsets = [1, 0, 0], sizes = [1, 1, 32], strides = [1, 1, 1]} : vector<2x4x32xf32> to vector<1x1x32xf32>
    %393 = vector.shape_cast %392 : vector<1x1x32xf32> to vector<32xf32>
    %394 = vector.broadcast %391 : f32 to vector<32xf32>
    %395 = arith.mulf %394, %393 : vector<32xf32>
    %c31 = arith.constant 31 : index
    %396 = memref.load %arg1[%c31] : memref<64xf32, #tpu.memory_space<smem>>
    %397 = vector.extract_strided_slice %0 {offsets = [1, 1, 0], sizes = [1, 1, 32], strides = [1, 1, 1]} : vector<2x4x32xf32> to vector<1x1x32xf32>
    %398 = vector.shape_cast %397 : vector<1x1x32xf32> to vector<32xf32>
    %399 = vector.broadcast %396 : f32 to vector<32xf32>
    %400 = arith.mulf %399, %398 : vector<32xf32>
    %401 = arith.addf %395, %400 : vector<32xf32>
    %c47 = arith.constant 47 : index
    %402 = memref.load %arg1[%c47] : memref<64xf32, #tpu.memory_space<smem>>
    %403 = vector.extract_strided_slice %0 {offsets = [1, 2, 0], sizes = [1, 1, 32], strides = [1, 1, 1]} : vector<2x4x32xf32> to vector<1x1x32xf32>
    %404 = vector.shape_cast %403 : vector<1x1x32xf32> to vector<32xf32>
    %405 = vector.broadcast %402 : f32 to vector<32xf32>
    %406 = arith.mulf %405, %404 : vector<32xf32>
    %407 = arith.addf %401, %406 : vector<32xf32>
    %c63 = arith.constant 63 : index
    %408 = memref.load %arg1[%c63] : memref<64xf32, #tpu.memory_space<smem>>
    %409 = vector.extract_strided_slice %0 {offsets = [1, 3, 0], sizes = [1, 1, 32], strides = [1, 1, 1]} : vector<2x4x32xf32> to vector<1x1x32xf32>
    %410 = vector.shape_cast %409 : vector<1x1x32xf32> to vector<32xf32>
    %411 = vector.broadcast %408 : f32 to vector<32xf32>
    %412 = arith.mulf %411, %410 : vector<32xf32>
    %413 = arith.addf %407, %412 : vector<32xf32>
    %c1_48 = arith.constant 1 : index
    %c7_49 = arith.constant 7 : index
    %c0_50 = arith.constant 0 : index
    %414 = vector.load %arg6[%c1_48, %c7_49, %c0_50] : memref<2x8x32xf32, #tpu.memory_space<vmem>>, vector<1x1x32xf32>
    %415 = vector.shape_cast %414 : vector<1x1x32xf32> to vector<32xf32>
    %416 = vector.shape_cast %413 : vector<32xf32> to vector<1x1x32xf32>
    tpu.vector_store %arg6[%c1_48, %c7_49, %c0_50], %416 {strides = array<i32>} : memref<2x8x32xf32, #tpu.memory_space<vmem>>, vector<1x1x32xf32>,
    %c0_51 = arith.constant 0 : index
    %c0_52 = arith.constant 0 : index
    %417 = vector.load %arg3[%c0_51, %c0_52] : memref<2x32xf32, #tpu.memory_space<vmem>>, vector<2x32xf32>
    %c0_53 = arith.constant 0 : index
    %c0_54 = arith.constant 0 : index
    %418 = vector.load %arg4[%c0_53, %c0_54] : memref<32x16xf32, #tpu.memory_space<vmem>>, vector<32x16xf32>
    %cst = arith.constant dense<0.000000e+00> : vector<2x16xf32>
    %419 = tpu.matmul %417, %418, %cst {dimension_numbers = #tpu.dot_dimension_numbers<[1], [0], [0], [1], [0, 0, 1, 1], [], []>} : vector<2x32xf32>, vector<32x16xf32>, vector<2x16xf32> -> vector<2x16xf32>
    %c0_55 = arith.constant 0 : index
    %c0_56 = arith.constant 0 : index
    %420 = vector.load %arg5[%c0_55, %c0_56] : memref<1x16xf32, #tpu.memory_space<vmem>>, vector<1x16xf32>
    %421 = vector.broadcast %420 : vector<1x16xf32> to vector<2x16xf32>
    %422 = arith.addf %419, %421 : vector<2x16xf32>
    %c0_57 = arith.constant 0 : index
    %c0_58 = arith.constant 0 : index
    %423 = vector.load %arg7[%c0_57, %c0_58] : memref<2x16xf32, #tpu.memory_space<vmem>>, vector<2x16xf32>
    tpu.vector_store %arg7[%c0_57, %c0_58], %422 {strides = array<i32>} : memref<2x16xf32, #tpu.memory_space<vmem>>, vector<2x16xf32>,
    return
  }
  func.func @transform_0(%arg0: i32) -> i32 {
    %c0_i32 = arith.constant 0 : i32
    %c0_i32_0 = arith.constant 0 : i32
    return %c0_i32 : i32
  }
  func.func @transform_1(%arg0: i32) -> (i32, i32, i32) {
    %c0_i32 = arith.constant 0 : i32
    %c0_i32_0 = arith.constant 0 : i32
    %c0_i32_1 = arith.constant 0 : i32
    %c0_i32_2 = arith.constant 0 : i32
    return %c0_i32, %c0_i32_0, %c0_i32_1 : i32, i32, i32
  }
  func.func @transform_2(%arg0: i32) -> (i32, i32) {
    %c0_i32 = arith.constant 0 : i32
    %c0_i32_0 = arith.constant 0 : i32
    %c0_i32_1 = arith.constant 0 : i32
    return %c0_i32, %c0_i32_0 : i32, i32
  }
  func.func @transform_3(%arg0: i32) -> (i32, i32) {
    %c0_i32 = arith.constant 0 : i32
    %c0_i32_0 = arith.constant 0 : i32
    %c0_i32_1 = arith.constant 0 : i32
    return %c0_i32, %c0_i32_0 : i32, i32
  }
  func.func @transform_4(%arg0: i32) -> (i32, i32) {
    %c0_i32 = arith.constant 0 : i32
    %c0_i32_0 = arith.constant 0 : i32
    %c0_i32_1 = arith.constant 0 : i32
    return %c0_i32, %c0_i32_0 : i32, i32
  }
  func.func @transform_5(%arg0: i32) -> (i32, i32, i32) {
    %c0_i32 = arith.constant 0 : i32
    %c0_i32_0 = arith.constant 0 : i32
    %c0_i32_1 = arith.constant 0 : i32
    %c0_i32_2 = arith.constant 0 : i32
    return %c0_i32, %c0_i32_0, %c0_i32_1 : i32, i32, i32
  }
  func.func @transform_6(%arg0: i32) -> (i32, i32) {
    %c0_i32 = arith.constant 0 : i32
    %c0_i32_0 = arith.constant 0 : i32
    %c0_i32_1 = arith.constant 0 : i32
    return %c0_i32, %c0_i32_0 : i32, i32
  }
}

</mosaic_0001>

<llo_original>
// kernel: tpu_custom_call.1
$region0: #{tpu_custom_call.1}
  #allocation0 [shape = 'u32[]', space=smem, size = 0x4, offset = 0x4, fixed_abs, tag = 'smem constant byte address 0x4 - core index']
  #allocation1 [shape = 'u32[144,128]{1,0:T(1,128)}', space=vmem, size = 0x12000, scoped, tag = 'internal scratch']
  %s0 = inlined_call_operand.vmem [shape: f32[64], index: 0, kind: input, shape index: {}]
  %s1 = inlined_call_operand.vmem [shape: f32[2,4,32], index: 1, kind: input, shape index: {}]
  %s2 = inlined_call_operand.vmem [shape: f32[2,32], index: 2, kind: input, shape index: {}]
  %s3 = inlined_call_operand.vmem [shape: f32[32,16], index: 3, kind: input, shape index: {}]
  %s4 = inlined_call_operand.vmem [shape: f32[1,16], index: 4, kind: input, shape index: {}]
  %s5 = inlined_call_operand.hbm [shape: f32[2,8,32], index: 5, kind: output, shape index: {0}]
  %s6 = inlined_call_operand.hbm [shape: f32[2,16], index: 6, kind: output, shape index: {1}]
  %7 = xla_tuple %s5, %s6
  %s8 = sld [smem:[#allocation0]]
  $region42: #{tpu_custom_call.1} parent=0
    _
  %s10 = ssub.s32 1, %s8
  %s11 = scalar_select 0, %s10, %s8
  $region1: #{tpu_custom_call.1} parent=0
    #allocation2 [shape = 'u8[512]{0}', space=smem, size = 0x200, scoped, tag = 'input window, operand 0, single buffered']
    #allocation3 [shape = 's32[1]{0}', space=sflag, size = 0x4, scoped, tag = 'scoped memory for tpu_custom_call.1']
    #allocation4 [shape = 's32[1]{0}', space=sflag, size = 0x4, scoped, tag = 'scoped memory for tpu_custom_call.1']
    #allocation5 [shape = 'u8[8192]{0}', space=vmem, size = 0x2000, scoped, tag = 'output window, operand 0, single buffered']
    #allocation6 [shape = 'u8[1024]{0}', space=vmem, size = 0x400, scoped, tag = 'output window, operand 1, single buffered']
    #allocation7 [shape = 's32[1]{0}', space=sflag, size = 0x4, scoped, tag = 'scoped memory for tpu_custom_call.1']
    %12 = vsyncpa [#allocation4], 0
    %13 = vsyncpa [#allocation3], 0
    %14 = vsyncpa [#allocation7], 0
    // Predicated region
    $region2: #{tpu_custom_call.1} parent=1 // pred_check
      _
    $region3: #{tpu_custom_call.1} parent=1 // pred_check_branch
      %16 = sbr.rel (0) target = $region5
    $region4: #{tpu_custom_call.1} parent=1 // pred_region
      %s18 = ssub.s32 16, 16
      %19 = vsyncadd [#allocation4], %s18
      %s21 = sshll.u32 %s0, 4
      %s22 = int_to_ptr.vmem [resolvable:$true] %s21
      %24 = dma.vmem_to_smem %s22, 16, [#allocation2], [#allocation4]
    $region5: #{tpu_custom_call.1} parent=1 // pred_fallthru
      _
    // Predicated region
    $region6: #{tpu_custom_call.1} parent=1 // pred_check
      _
    $region7: #{tpu_custom_call.1} parent=1 // pred_check_branch
      %26 = sbr.rel (0) target = $region9
    $region8: #{tpu_custom_call.1} parent=1 // pred_region
      _
    $region9: #{tpu_custom_call.1} parent=1 // pred_fallthru
      _
    // Predicated region
    $region10: #{tpu_custom_call.1} parent=1 // pred_check
      _
    $region11: #{tpu_custom_call.1} parent=1 // pred_check_branch
      %28 = sbr.rel (0) target = $region13
    $region12: #{tpu_custom_call.1} parent=1 // pred_region
      _
    $region13: #{tpu_custom_call.1} parent=1 // pred_fallthru
      _
    // Predicated region
    $region14: #{tpu_custom_call.1} parent=1 // pred_check
      _
    $region15: #{tpu_custom_call.1} parent=1 // pred_check_branch
      %30 = sbr.rel (0) target = $region17
    $region16: #{tpu_custom_call.1} parent=1 // pred_region
      _
    $region17: #{tpu_custom_call.1} parent=1 // pred_fallthru
      _
    // Predicated region
    $region18: #{tpu_custom_call.1} parent=1 // pred_check
      _
    $region19: #{tpu_custom_call.1} parent=1 // pred_check_branch
      %32 = sbr.rel (0) target = $region21
    $region20: #{tpu_custom_call.1} parent=1 // pred_region
      _
    $region21: #{tpu_custom_call.1} parent=1 // pred_fallthru
      _
    // Predicated region
    $region22: #{tpu_custom_call.1} parent=1 // pred_check
      _
    $region23: #{tpu_custom_call.1} parent=1 // pred_check_branch
      %34 = sbr.rel (0) target = $region25
    $region24: #{tpu_custom_call.1} parent=1 // pred_region
      %35 = dma.done [#allocation4], 16
    $region25: #{tpu_custom_call.1} parent=1 // pred_fallthru
      _
    %36 = sfence
    %v37 = vld [vmem:[%s1] sm:$0xf]
    %v38 = vld [vmem:[%s1 + $0x4] sm:$0xf]
    %s39 = sld [smem:[#allocation2]]
    %v40 = vstv %s39
    %v41 = vmul.f32 %v40, %v37
    %s42 = sld [smem:[#allocation2 + $0x10]]
    %v43 = vstv %s42
    %v44 = vmul.f32 %v43, %v37
    %v46 = vrot.slane %v44, 1
    %v48 = vadd.f32 %v41, %v46
    %s49 = sld [smem:[#allocation2 + $0x20]]
    %v50 = vstv %s49
    %v51 = vmul.f32 %v50, %v37
    %v53 = vrot.slane %v51, 2
    %v55 = vadd.f32 %v48, %v53
    %s56 = sld [smem:[#allocation2 + $0x30]]
    %v57 = vstv %s56
    %v58 = vmul.f32 %v57, %v37
    %v60 = vrot.slane %v58, 3
    %v62 = vadd.f32 %v55, %v60
    %vm63 = vcmask 253952
    %64 = vst.msk [vmem:[#allocation5] sm:$0x1] %vm63, %v62
    %s65 = sld [smem:[#allocation2 + $0x2]]
    %v66 = vstv %s65
    %v67 = vmul.f32 %v66, %v37
    %s68 = sld [smem:[#allocation2 + $0x12]]
    %v69 = vstv %s68
    %v70 = vmul.f32 %v69, %v37
    %v72 = vrot.slane %v70, 1
    %v74 = vadd.f32 %v67, %v72
    %s75 = sld [smem:[#allocation2 + $0x22]]
    %v76 = vstv %s75
    %v77 = vmul.f32 %v76, %v37
    %v79 = vrot.slane %v77, 2
    %v81 = vadd.f32 %v74, %v79
    %s82 = sld [smem:[#allocation2 + $0x32]]
    %v83 = vstv %s82
    %v84 = vmul.f32 %v83, %v37
    %v86 = vrot.slane %v84, 3
    %v88 = vadd.f32 %v81, %v86
    %89 = vst.msk [vmem:[#allocation5 + $0x1] sm:$0x1] %vm63, %v88
    %s90 = sld [smem:[#allocation2 + $0x4]]
    %v91 = vstv %s90
    %v92 = vmul.f32 %v91, %v37
    %s93 = sld [smem:[#allocation2 + $0x14]]
    %v94 = vstv %s93
    %v95 = vmul.f32 %v94, %v37
    %v97 = vrot.slane %v95, 1
    %v99 = vadd.f32 %v92, %v97
    %s100 = sld [smem:[#allocation2 + $0x24]]
    %v101 = vstv %s100
    %v102 = vmul.f32 %v101, %v37
    %v104 = vrot.slane %v102, 2
    %v106 = vadd.f32 %v99, %v104
    %s107 = sld [smem:[#allocation2 + $0x34]]
    %v108 = vstv %s107
    %v109 = vmul.f32 %v108, %v37
    %v111 = vrot.slane %v109, 3
    %v113 = vadd.f32 %v106, %v111
    %114 = vst.msk [vmem:[#allocation5 + $0x2] sm:$0x1] %vm63, %v113
    %s115 = sld [smem:[#allocation2 + $0x6]]
    %v116 = vstv %s115
    %v117 = vmul.f32 %v116, %v37
    %s118 = sld [smem:[#allocation2 + $0x16]]
    %v119 = vstv %s118
    %v120 = vmul.f32 %v119, %v37
    %v122 = vrot.slane %v120, 1
    %v124 = vadd.f32 %v117, %v122
    %s125 = sld [smem:[#allocation2 + $0x26]]
    %v126 = vstv %s125
    %v127 = vmul.f32 %v126, %v37
    %v129 = vrot.slane %v127, 2
    %v131 = vadd.f32 %v124, %v129
    %s132 = sld [smem:[#allocation2 + $0x36]]
    %v133 = vstv %s132
    %v134 = vmul.f32 %v133, %v37
    %v136 = vrot.slane %v134, 3
    %v138 = vadd.f32 %v131, %v136
    %139 = vst.msk [vmem:[#allocation5 + $0x3] sm:$0x1] %vm63, %v138
    %s140 = sld [smem:[#allocation2 + $0x8]]
    %v141 = vstv %s140
    %v142 = vmul.f32 %v141, %v37
    %s143 = sld [smem:[#allocation2 + $0x18]]
    %v144 = vstv %s143
    %v145 = vmul.f32 %v144, %v37
    %v147 = vrot.slane %v145, 1
    %v149 = vadd.f32 %v142, %v147
    %s150 = sld [smem:[#allocation2 + $0x28]]
    %v151 = vstv %s150
    %v152 = vmul.f32 %v151, %v37
    %v154 = vrot.slane %v152, 2
    %v156 = vadd.f32 %v149, %v154
    %s157 = sld [smem:[#allocation2 + $0x38]]
    %v158 = vstv %s157
    %v159 = vmul.f32 %v158, %v37
    %v161 = vrot.slane %v159, 3
    %v163 = vadd.f32 %v156, %v161
    %164 = vst.msk [vmem:[#allocation5 + $0x4] sm:$0x1] %vm63, %v163
    %s165 = sld [smem:[#allocation2 + $0xa]]
    %v166 = vstv %s165
    %v167 = vmul.f32 %v166, %v37
    %s168 = sld [smem:[#allocation2 + $0x1a]]
    %v169 = vstv %s168
    %v170 = vmul.f32 %v169, %v37
    %v172 = vrot.slane %v170, 1
    %v174 = vadd.f32 %v167, %v172
    %s175 = sld [smem:[#allocation2 + $0x2a]]
    %v176 = vstv %s175
    %v177 = vmul.f32 %v176, %v37
    %v179 = vrot.slane %v177, 2
    %v181 = vadd.f32 %v174, %v179
    %s182 = sld [smem:[#allocation2 + $0x3a]]
    %v183 = vstv %s182
    %v184 = vmul.f32 %v183, %v37
    %v186 = vrot.slane %v184, 3
    %v188 = vadd.f32 %v181, %v186
    %189 = vst.msk [vmem:[#allocation5 + $0x5] sm:$0x1] %vm63, %v188
    %s190 = sld [smem:[#allocation2 + $0xc]]
    %v191 = vstv %s190
    %v192 = vmul.f32 %v191, %v37
    %s193 = sld [smem:[#allocation2 + $0x1c]]
    %v194 = vstv %s193
    %v195 = vmul.f32 %v194, %v37
    %v197 = vrot.slane %v195, 1
    %v199 = vadd.f32 %v192, %v197
    %s200 = sld [smem:[#allocation2 + $0x2c]]
    %v201 = vstv %s200
    %v202 = vmul.f32 %v201, %v37
    %v204 = vrot.slane %v202, 2
    %v206 = vadd.f32 %v199, %v204
    %s207 = sld [smem:[#allocation2 + $0x3c]]
    %v208 = vstv %s207
    %v209 = vmul.f32 %v208, %v37
    %v211 = vrot.slane %v209, 3
    %v213 = vadd.f32 %v206, %v211
    %214 = vst.msk [vmem:[#allocation5 + $0x6] sm:$0x1] %vm63, %v213
    %s215 = sld [smem:[#allocation2 + $0xe]]
    %v216 = vstv %s215
    %v217 = vmul.f32 %v216, %v37
    %s218 = sld [smem:[#allocation2 + $0x1e]]
    %v219 = vstv %s218
    %v220 = vmul.f32 %v219, %v37
    %v222 = vrot.slane %v220, 1
    %v224 = vadd.f32 %v217, %v222
    %s225 = sld [smem:[#allocation2 + $0x2e]]
    %v226 = vstv %s225
    %v227 = vmul.f32 %v226, %v37
    %v229 = vrot.slane %v227, 2
    %v231 = vadd.f32 %v224, %v229
    %s232 = sld [smem:[#allocation2 + $0x3e]]
    %v233 = vstv %s232
    %v234 = vmul.f32 %v233, %v37
    %v236 = vrot.slane %v234, 3
    %v238 = vadd.f32 %v231, %v236
    %239 = vst.msk [vmem:[#allocation5 + $0x7] sm:$0x1] %vm63, %v238
    %s240 = sld [smem:[#allocation2 + $0x1]]
    %v241 = vstv %s240
    %v242 = vmul.f32 %v241, %v38
    %s243 = sld [smem:[#allocation2 + $0x11]]
    %v244 = vstv %s243
    %v245 = vmul.f32 %v244, %v38
    %v247 = vrot.slane %v245, 1
    %v249 = vadd.f32 %v242, %v247
    %s250 = sld [smem:[#allocation2 + $0x21]]
    %v251 = vstv %s250
    %v252 = vmul.f32 %v251, %v38
    %v254 = vrot.slane %v252, 2
    %v256 = vadd.f32 %v249, %v254
    %s257 = sld [smem:[#allocation2 + $0x31]]
    %v258 = vstv %s257
    %v259 = vmul.f32 %v258, %v38
    %v261 = vrot.slane %v259, 3
    %v263 = vadd.f32 %v256, %v261
    %s264 = scalar_lea.vmem [#allocation5], 8
    %265 = vst.msk [vmem:[%s264] sm:$0x1] %vm63, %v263
    %s266 = sld [smem:[#allocation2 + $0x3]]
    %v267 = vstv %s266
    %v268 = vmul.f32 %v267, %v38
    %s269 = sld [smem:[#allocation2 + $0x13]]
    %v270 = vstv %s269
    %v271 = vmul.f32 %v270, %v38
    %v273 = vrot.slane %v271, 1
    %v275 = vadd.f32 %v268, %v273
    %s276 = sld [smem:[#allocation2 + $0x23]]
    %v277 = vstv %s276
    %v278 = vmul.f32 %v277, %v38
    %v280 = vrot.slane %v278, 2
    %v282 = vadd.f32 %v275, %v280
    %s283 = sld [smem:[#allocation2 + $0x33]]
    %v284 = vstv %s283
    %v285 = vmul.f32 %v284, %v38
    %v287 = vrot.slane %v285, 3
    %v289 = vadd.f32 %v282, %v287
    %290 = vst.msk [vmem:[%s264 + $0x1] sm:$0x1] %vm63, %v289
    %s291 = sld [smem:[#allocation2 + $0x5]]
    %v292 = vstv %s291
    %v293 = vmul.f32 %v292, %v38
    %s294 = sld [smem:[#allocation2 + $0x15]]
    %v295 = vstv %s294
    %v296 = vmul.f32 %v295, %v38
    %v298 = vrot.slane %v296, 1
    %v300 = vadd.f32 %v293, %v298
    %s301 = sld [smem:[#allocation2 + $0x25]]
    %v302 = vstv %s301
    %v303 = vmul.f32 %v302, %v38
    %v305 = vrot.slane %v303, 2
    %v307 = vadd.f32 %v300, %v305
    %s308 = sld [smem:[#allocation2 + $0x35]]
    %v309 = vstv %s308
    %v310 = vmul.f32 %v309, %v38
    %v312 = vrot.slane %v310, 3
    %v314 = vadd.f32 %v307, %v312
    %315 = vst.msk [vmem:[%s264 + $0x2] sm:$0x1] %vm63, %v314
    %s316 = sld [smem:[#allocation2 + $0x7]]
    %v317 = vstv %s316
    %v318 = vmul.f32 %v317, %v38
    %s319 = sld [smem:[#allocation2 + $0x17]]
    %v320 = vstv %s319
    %v321 = vmul.f32 %v320, %v38
    %v323 = vrot.slane %v321, 1
    %v325 = vadd.f32 %v318, %v323
    %s326 = sld [smem:[#allocation2 + $0x27]]
    %v327 = vstv %s326
    %v328 = vmul.f32 %v327, %v38
    %v330 = vrot.slane %v328, 2
    %v332 = vadd.f32 %v325, %v330
    %s333 = sld [smem:[#allocation2 + $0x37]]
    %v334 = vstv %s333
    %v335 = vmul.f32 %v334, %v38
    %v337 = vrot.slane %v335, 3
    %v339 = vadd.f32 %v332, %v337
    %340 = vst.msk [vmem:[%s264 + $0x3] sm:$0x1] %vm63, %v339
    %s341 = sld [smem:[#allocation2 + $0x9]]
    %v342 = vstv %s341
    %v343 = vmul.f32 %v342, %v38
    %s344 = sld [smem:[#allocation2 + $0x19]]
    %v345 = vstv %s344
    %v346 = vmul.f32 %v345, %v38
    %v348 = vrot.slane %v346, 1
    %v350 = vadd.f32 %v343, %v348
    %s351 = sld [smem:[#allocation2 + $0x29]]
    %v352 = vstv %s351
    %v353 = vmul.f32 %v352, %v38
    %v355 = vrot.slane %v353, 2
    %v357 = vadd.f32 %v350, %v355
    %s358 = sld [smem:[#allocation2 + $0x39]]
    %v359 = vstv %s358
    %v360 = vmul.f32 %v359, %v38
    %v362 = vrot.slane %v360, 3
    %v364 = vadd.f32 %v357, %v362
    %365 = vst.msk [vmem:[%s264 + $0x4] sm:$0x1] %vm63, %v364
    %s366 = sld [smem:[#allocation2 + $0xb]]
    %v367 = vstv %s366
    %v368 = vmul.f32 %v367, %v38
    %s369 = sld [smem:[#allocation2 + $0x1b]]
    %v370 = vstv %s369
    %v371 = vmul.f32 %v370, %v38
    %v373 = vrot.slane %v371, 1
    %v375 = vadd.f32 %v368, %v373
    %s376 = sld [smem:[#allocation2 + $0x2b]]
    %v377 = vstv %s376
    %v378 = vmul.f32 %v377, %v38
    %v380 = vrot.slane %v378, 2
    %v382 = vadd.f32 %v375, %v380
    %s383 = sld [smem:[#allocation2 + $0x3b]]
    %v384 = vstv %s383
    %v385 = vmul.f32 %v384, %v38
    %v387 = vrot.slane %v385, 3
    %v389 = vadd.f32 %v382, %v387
    %390 = vst.msk [vmem:[%s264 + $0x5] sm:$0x1] %vm63, %v389
    %s391 = sld [smem:[#allocation2 + $0xd]]
    %v392 = vstv %s391
    %v393 = vmul.f32 %v392, %v38
    %s394 = sld [smem:[#allocation2 + $0x1d]]
    %v395 = vstv %s394
    %v396 = vmul.f32 %v395, %v38
    %v398 = vrot.slane %v396, 1
    %v400 = vadd.f32 %v393, %v398
    %s401 = sld [smem:[#allocation2 + $0x2d]]
    %v402 = vstv %s401
    %v403 = vmul.f32 %v402, %v38
    %v405 = vrot.slane %v403, 2
    %v407 = vadd.f32 %v400, %v405
    %s408 = sld [smem:[#allocation2 + $0x3d]]
    %v409 = vstv %s408
    %v410 = vmul.f32 %v409, %v38
    %v412 = vrot.slane %v410, 3
    %v414 = vadd.f32 %v407, %v412
    %415 = vst.msk [vmem:[%s264 + $0x6] sm:$0x1] %vm63, %v414
    %s416 = sld [smem:[#allocation2 + $0xf]]
    %v417 = vstv %s416
    %v418 = vmul.f32 %v417, %v38
    %s419 = sld [smem:[#allocation2 + $0x1f]]
    %v420 = vstv %s419
    %v421 = vmul.f32 %v420, %v38
    %v423 = vrot.slane %v421, 1
    %v425 = vadd.f32 %v418, %v423
    %s426 = sld [smem:[#allocation2 + $0x2f]]
    %v427 = vstv %s426
    %v428 = vmul.f32 %v427, %v38
    %v430 = vrot.slane %v428, 2
    %v432 = vadd.f32 %v425, %v430
    %s433 = sld [smem:[#allocation2 + $0x3f]]
    %v434 = vstv %s433
    %v435 = vmul.f32 %v434, %v38
    %v437 = vrot.slane %v435, 3
    %v439 = vadd.f32 %v432, %v437
    %440 = vst.msk [vmem:[%s264 + $0x7] sm:$0x1] %vm63, %v439
    %v441 = vld [vmem:[%s2] sm:$0x3]
    %v442 = vld [vmem:[%s3] sm:$0xff]
    %v443 = vld [vmem:[%s3 + $0x8] sm:$0xff]
    %v444 = vld [vmem:[%s3 + $0x10] sm:$0xff]
    %v445 = vld [vmem:[%s3 + $0x18] sm:$0xff]
    %v446 = vld [vmem:[%s4] sm:$0x1]
    %v448 = vlaneseq
    %v449 = vshrl.u32 %v448, 7
    %v450 = vsub.s32 0, %v449
    %v451 = vrot.slane %v446, %v450
    %vm453 = vcmask 261120
    %v455 = vsel %vm453, %v441, 0
    %457 = vmatprep.subr.mxu0 0.0
    %458 = vmatpush1.msra.mxu0 %v442
    %459 = vmatprep.subr.mxu0 0.0
    %460 = vmatpush1.msra.mxu0 %v443
    %461 = vmatprep.subr.mxu0 0.0
    %462 = vmatpush1.msra.mxu0 %v444
    %463 = vmatprep.subr.mxu0 0.0
    %464 = vmatpush1.msra.mxu0 %v445
    %465 = vmatprep.subr.mxu0 0.0
    %466 = vmatpush1.msra.mxu0 0.0
    %467 = vmatprep.subr.mxu0 0.0
    %468 = vmatpush1.msra.mxu0 0.0
    %469 = vmatprep.subr.mxu0 0.0
    %470 = vmatpush1.msra.mxu0 0.0
    %471 = vmatprep.subr.mxu0 0.0
    %472 = vmatpush1.msra.mxu0 0.0
    %473 = vmatprep.subr.mxu0 0.0
    %474 = vmatpush1.msra.mxu0 0.0
    %475 = vmatprep.subr.mxu0 0.0
    %476 = vmatpush1.msra.mxu0 0.0
    %477 = vmatprep.subr.mxu0 0.0
    %478 = vmatpush1.msra.mxu0 0.0
    %479 = vmatprep.subr.mxu0 0.0
    %480 = vmatpush1.msra.mxu0 0.0
    %481 = vmatprep.subr.mxu0 0.0
    %482 = vmatpush1.msra.mxu0 0.0
    %483 = vmatprep.subr.mxu0 0.0
    %484 = vmatpush1.msra.mxu0 0.0
    %485 = vmatprep.subr.mxu0 0.0
    %486 = vmatpush1.msra.mxu0 0.0
    %487 = vmatprep.subr.mxu0 0.0
    %488 = vmatpush1.msra.mxu0 0.0
    %489 = vmatprep.subr.mxu0 0.0
    %490 = vmatpush1.msra.mxu0 0.0
    %491 = vmatprep.subr.mxu0 0.0
    %492 = vmatpush1.msra.mxu0 0.0
    %493 = vmatprep.subr.mxu0 0.0
    %494 = vmatpush1.msra.mxu0 0.0
    %495 = vmatprep.subr.mxu0 0.0
    %496 = vmatpush1.msra.mxu0 0.0
    %497 = vmatprep.subr.mxu0 0.0
    %498 = vmatpush1.msra.mxu0 0.0
    %499 = vmatprep.subr.mxu0 0.0
    %500 = vmatpush1.msra.mxu0 0.0
    %501 = vmatprep.subr.mxu0 0.0
    %502 = vmatpush1.msra.mxu0 0.0
    %503 = vmatprep.subr.mxu0 0.0
    %504 = vmatpush1.msra.mxu0 0.0
    %505 = vmatprep.subr.mxu0 0.0
    %506 = vmatpush1.msra.mxu0 0.0
    %507 = vmatprep.subr.mxu0 0.0
    %508 = vmatpush1.msra.mxu0 0.0
    %509 = vmatprep.subr.mxu0 0.0
    %510 = vmatpush1.msra.mxu0 0.0
    %511 = vmatprep.subr.mxu0 0.0
    %512 = vmatpush1.msra.mxu0 0.0
    %513 = vmatprep.subr.mxu0 0.0
    %514 = vmatpush1.msra.mxu0 0.0
    %515 = vmatprep.subr.mxu0 0.0
    %516 = vmatpush1.msra.mxu0 0.0
    %517 = vmatprep.subr.mxu0 0.0
    %518 = vmatpush1.msra.mxu0 0.0
    %519 = vmatprep.subr.mxu0 0.0
    %520 = vmatpush1.msra.mxu0 0.0
    %521 = vmatprep.mubr.f32.mxu0 0.0
    %522 = vmatmul.mubr.f32.gmra.mrb[0].mxu0 %v455
    %v523 = vpop.f32.mrb[0].mxu0
    %v524 = vadd.f32 %v451, %v523
    %v525 = vpop.f32.mrb[0].mxu0
    %526 = vdwg.mxu0
    %vm527 = vcmask 123904
    %528 = vst.msk [vmem:[#allocation6] sm:$0x3] %vm527, %v524
    // Predicated region
    $region26: #{tpu_custom_call.1} parent=1 // pred_check
      _
    $region27: #{tpu_custom_call.1} parent=1 // pred_check_branch
      %530 = sbr.rel (0) target = $region29
    $region28: #{tpu_custom_call.1} parent=1 // pred_region
      %s532 = ssub.s32 256, 256
      %533 = vsyncadd [#allocation3], %s532
      %s534 = sshll.u32 [#allocation5], 4
      %s535 = int_to_ptr.vmem [resolvable:$true] %s534
      %540 = dma.vmem_to_hbm [thread:$0]  %s535, 256, %s5, [#allocation3], 128, 128, 8
    $region29: #{tpu_custom_call.1} parent=1 // pred_fallthru
      _
    // Predicated region
    $region30: #{tpu_custom_call.1} parent=1 // pred_check
      _
    $region31: #{tpu_custom_call.1} parent=1 // pred_check_branch
      %542 = sbr.rel (0) target = $region33
    $region32: #{tpu_custom_call.1} parent=1 // pred_region
      %s544 = ssub.s32 32, 32
      %545 = vsyncadd [#allocation7], %s544
      %s547 = sshll.u32 [#allocation6], 4
      %s548 = int_to_ptr.vmem [resolvable:$true] %s547
      %550 = dma.vmem_to_hbm [thread:$0]  %s548, 32, %s6, [#allocation7]
    $region33: #{tpu_custom_call.1} parent=1 // pred_fallthru
      _
    // Predicated region
    $region34: #{tpu_custom_call.1} parent=1 // pred_check
      _
    $region35: #{tpu_custom_call.1} parent=1 // pred_check_branch
      %552 = sbr.rel (0) target = $region37
    $region36: #{tpu_custom_call.1} parent=1 // pred_region
      %553 = dma.done [#allocation3], 256
    $region37: #{tpu_custom_call.1} parent=1 // pred_fallthru
      _
    // Predicated region
    $region38: #{tpu_custom_call.1} parent=1 // pred_check
      _
    $region39: #{tpu_custom_call.1} parent=1 // pred_check_branch
      %555 = sbr.rel (0) target = $region41
    $region40: #{tpu_custom_call.1} parent=1 // pred_region
      %556 = dma.done [#allocation7], 32
    $region41: #{tpu_custom_call.1} parent=1 // pred_fallthru
      _
    %557 = vsyncpa [#allocation3], 1
    %558 = vsyncpa [#allocation7], 1
    %559 = vsyncpa [#allocation4], 1

</llo_original>
